<compile_context>
chip_gen: v6e
topology: v6e:2x2x1
jax: 0.10.0
libtpu: 0.0.40
codegen_flags: <defaults>
</compile_context>

<pallas_src>
import jax
import jax.numpy as jnp
from jax import lax
from jax.experimental import pallas as pl
from jax.experimental.pallas import tpu as pltpu


def _round_up(x, m):
    return ((x + m - 1) // m) * m


def _choose_batch_tile(B, D, itemsize, tb=None):
    """Pick the batch tile (lanes of the output row)."""
    if tb is None:
        tb = 2048 if D <= 512 else 1024
    tb = max(256, _round_up(tb, 256))
    # Keep the double-buffered x stream within a modest slice of VMEM.
    while tb > 256 and 2 * tb * D * itemsize > (16 << 20):
        tb //= 2
    if B <= 256:
        return B                      # single block == full dim (legal block shape)
    if B <= tb:
        # >= 2 tiles so v7x's two TensorCores both get work.
        return _round_up(-(-B // 2), 256)
    return tb


def _choose_h_chunk(H):
    """H chunk so the (hc, TB) f32 intermediate stays small."""
    if H > 256 and H % 256 == 0:
        return 256
    return H


def _make_kernel(hc, n_chunks):
    def kernel(x_ref, w1_ref, b1_ref, w2_ref, b2_ref, o_ref):
        # x_ref : (TB, D) batch-major tile (streamed, bf16 or f32)
        # w1_ref: (H, D)  first Linear weight, PyTorch (out, in) layout (resident)
        # b1_ref: (H, 1)  f32 (resident)
        # w2_ref: (H, 1)  f32 second Linear weight as a column (resident)
        # b2_ref: (1, 1)  f32 scalar in SMEM
        # o_ref : (1, TB) lane-dense f32 output row
        x = x_ref[...]
        tb = x.shape[0]

        def accum(acc, w1c, b1c, w2c):
            # Layer 1 on the MXU: contract the shared feature (last) dim of
            # (hc, D) and (TB, D) -> (hc, TB), batch on lanes, f32 accumulate.
            h = lax.dot_general(w1c, x, (((1,), (1,)), ((), ())),
                                preferred_element_type=jnp.float32)
            h = jnp.maximum(h + b1c, 0.0)          # bias bcast over lanes + ReLU
            # Layer 2 (width 1): VPU multiply + sublane (XLU) reduce -> (1, TB).
            return acc + jnp.sum(h * w2c, axis=0, keepdims=True)

        acc0 = jnp.zeros((1, tb), jnp.float32)
        if n_chunks == 1:
            acc = accum(acc0, w1_ref[...], b1_ref[...], w2_ref[...])
        else:
            def body(c, acc):
                s = c * hc
                if not isinstance(s, int):
                    s = pl.multiple_of(s, hc)
                return accum(acc,
                             w1_ref[pl.ds(s, hc), :],
                             b1_ref[pl.ds(s, hc), :],
                             w2_ref[pl.ds(s, hc), :])
            acc = lax.fori_loop(0, n_chunks, body, acc0, unroll=True)

        o_ref[...] = (acc + b2_ref[0, 0]).astype(o_ref.dtype)

    return kernel


def _pallas_predictor(x, w1, b1, w2, b2, *, tb_eff, grid, bp, hc, n_chunks,
                      vmem_limit, single_buffer_weights):
    _, D = x.shape
    H = w1.shape[0]
    # Grid-invariant operands: constant index_map -> DMA'd once; request a
    # single VMEM buffer for them (halves resident-weight footprint).
    w_mode = ({"pipeline_mode": pl.Buffered(buffer_count=1)}
              if single_buffer_weights else {})
    return pl.pallas_call(
        _make_kernel(hc, n_chunks),
        out_shape=jax.ShapeDtypeStruct((1, bp), jnp.float32),
        grid=(grid,),
        in_specs=[
            pl.BlockSpec((tb_eff, D), lambda i: (i, 0)),              # streamed batch tile
            pl.BlockSpec((H, D), lambda i: (0, 0), **w_mode),         # resident W1
            pl.BlockSpec((H, 1), lambda i: (0, 0), **w_mode),         # resident b1
            pl.BlockSpec((H, 1), lambda i: (0, 0), **w_mode),         # resident w2
            pl.BlockSpec(memory_space=pltpu.MemorySpace.SMEM),        # scalar b2
        ],
        out_specs=pl.BlockSpec((1, tb_eff), lambda i: (0, i)),
        compiler_params=pltpu.CompilerParams(
            dimension_semantics=("parallel",),
            vmem_limit_bytes=vmem_limit,
        ),
    )(x, w1, b1, w2, b2)


def predictor_forward(feats, w1, b1, w2, b2, *, tb=None):
    """feats: (B, D); w1: (H, D); b1: (H, 1); w2: (H, 1); b2: (1, 1); H = 2*D.

    The matmul streams feats/w1 in their given dtype: pass bf16 upstream for
    the ~2x HBM-bandwidth win (accumulation and epilogue stay f32).
    For best MXU utilization choose D, H as multiples of 128 (v5e) / 256
    (v6e/v7x); tiny D (like the demo D=32) is padding/overhead dominated.
    """
    B, D = feats.shape
    H = w1.shape[0]
    w1 = w1.astype(feats.dtype)   # no-op if pre-cast upstream (recommended)
    itemsize = jnp.dtype(feats.dtype).itemsize

    tb_eff = _choose_batch_tile(B, D, itemsize, tb)
    grid = pl.cdiv(B, tb_eff)
    bp = grid * tb_eff            # output row padded to whole tiles; sliced below
    hc = _choose_h_chunk(H)
    n_chunks = H // hc

    # VMEM budget: resident weights + double-buffered x tile + h-chunk staging
    # + output rows + headroom; never below the 32 MiB scoped default.
    est = (H * D * itemsize                 # W1 (single-buffered)
           + 4 * H * 128 * 4                # b1, w2 (lane-padded f32, 2 bufs)
           + 2 * tb_eff * D * itemsize      # x double buffer
           + 2 * hc * tb_eff * 4            # h chunk staging
           + 2 * tb_eff * 4                 # output row
           + (8 << 20))                     # headroom
    vmem_limit = int(min(max(est, 32 << 20), 100 << 20))

    kwargs = dict(tb_eff=tb_eff, grid=grid, bp=bp, hc=hc, n_chunks=n_chunks,
                  vmem_limit=vmem_limit)
    try:
        out_row = jax.block_until_ready(
            _pallas_predictor(feats, w1, b1, w2, b2,
                              single_buffer_weights=True, **kwargs))
    except Exception:
        # pipeline_mode=pl.Buffered(1) not accepted by this jax build; default
        # (double-buffered) weight specs are still correct, just use more VMEM.
        out_row = _pallas_predictor(feats, w1, b1, w2, b2,
                                    single_buffer_weights=False, **kwargs)

    return out_row[0, :B].reshape(B, 1).astype(jnp.float32)


def init_params(key, dim):
    """Deterministic init mimicking nn.Linear's uniform(-1/sqrt(fan_in), ...)."""
    k1, k2, k3, k4 = jax.random.split(key, 4)
    hidden = 2 * dim
    bound1 = 1.0 / jnp.sqrt(dim)
    bound2 = 1.0 / jnp.sqrt(hidden)
    w1 = jax.random.uniform(k1, (hidden, dim), jnp.float32, -bound1, bound1)  # (H, D)
    b1 = jax.random.uniform(k2, (hidden, 1), jnp.float32, -bound1, bound1)    # (H, 1)
    w2 = jax.random.uniform(k3, (hidden, 1), jnp.float32, -bound2, bound2)    # (H, 1)
    b2 = jax.random.uniform(k4, (1, 1), jnp.float32, -bound2, bound2)         # (1, 1)
    return w1, b1, w2, b2


if __name__ == "__main__":
    key = jax.random.PRNGKey(0)

    # --- Test 1: tiny f32 path (dim=32, H=64, single full-batch tile) --------
    k_x, k_p = jax.random.split(key)
    B, dim = 8, 32
    feats = jax.random.normal(k_x, (B, dim), dtype=jnp.float32)
    w1, b1, w2, b2 = init_params(k_p, dim)
    out = jax.block_until_ready(predictor_forward(feats, w1, b1, w2, b2))
    ref = jnp.maximum(feats @ w1.T + b1.T, 0.0) @ w2 + b2[0, 0]
    assert out.shape == (B, 1)
    assert jnp.allclose(out, ref, atol=1e-4, rtol=1e-4), float(jnp.max(jnp.abs(out - ref)))

    # --- Test 2: bf16 streamed x/W1, multi-tile grid with a partial last tile -
    k2 = jax.random.fold_in(key, 2)
    k_x2, k_p2 = jax.random.split(k2)
    B2, dim2 = 600, 128
    feats2 = jax.random.normal(k_x2, (B2, dim2), dtype=jnp.float32)
    w1_2, b1_2, w2_2, b2_2 = init_params(k_p2, dim2)
    f2_bf, w1_2bf = feats2.astype(jnp.bfloat16), w1_2.astype(jnp.bfloat16)
    out2 = jax.block_until_ready(
        predictor_forward(f2_bf, w1_2bf, b1_2, w2_2, b2_2, tb=256))   # grid=3, last tile partial
    h2 = jnp.maximum(jnp.dot(f2_bf, w1_2bf.T, preferred_element_type=jnp.float32) + b1_2.T, 0.0)
    ref2 = h2 @ w2_2 + b2_2[0, 0]
    assert out2.shape == (B2, 1)
    assert jnp.allclose(out2, ref2, atol=1e-2, rtol=1e-2), float(jnp.max(jnp.abs(out2 - ref2)))

    # --- Test 3: H-chunked accumulation path (dim=512 -> H=1024, 4 chunks) ----
    k3 = jax.random.fold_in(key, 3)
    k_x3, k_p3 = jax.random.split(k3)
    B3, dim3 = 64, 512
    feats3 = jax.random.normal(k_x3, (B3, dim3), dtype=jnp.float32)
    w1_3, b1_3, w2_3, b2_3 = init_params(k_p3, dim3)
    f3_bf, w1_3bf = feats3.astype(jnp.bfloat16), w1_3.astype(jnp.bfloat16)
    out3 = jax.block_until_ready(predictor_forward(f3_bf, w1_3bf, b1_3, w2_3, b2_3))
    h3 = jnp.maximum(jnp.dot(f3_bf, w1_3bf.T, preferred_element_type=jnp.float32) + b1_3.T, 0.0)
    ref3 = h3 @ w2_3 + b2_3[0, 0]
    assert out3.shape == (B3, 1)
    assert jnp.allclose(out3, ref3, atol=1e-2, rtol=1e-2), float(jnp.max(jnp.abs(out3 - ref3)))

    print("KERNEL_OK")
</pallas_src>

<mosaic_0001>
module attributes {stable_mosaic.version = 11 : i64} {
  func.func @kernel(%arg0: i32, %arg1: memref<8x32xf32, #tpu.memory_space<vmem>>, %arg2: memref<64x32xf32, #tpu.memory_space<vmem>>, %arg3: memref<64x1xf32, #tpu.memory_space<vmem>>, %arg4: memref<64x1xf32, #tpu.memory_space<vmem>>, %arg5: memref<1x1xf32, #tpu.memory_space<smem>>, %arg6: memref<1x8xf32, #tpu.memory_space<vmem>>) attributes {dimension_semantics = [#tpu.dimension_semantics<parallel>], iteration_bounds = array<i64: 1>, scalar_prefetch = 0 : i64, scratch_operands = 0 : i64, tpu.core_type = #tpu.core_type<tc>, window_params = [{transform_indices = @transform_0, window_bounds = array<i64: 8, 32>}, {pipeline_mode = #tpu.pipeline_mode<synchronous>, transform_indices = @transform_1, window_bounds = array<i64: 64, 32>}, {pipeline_mode = #tpu.pipeline_mode<synchronous>, transform_indices = @transform_2, window_bounds = array<i64: 64, 1>}, {pipeline_mode = #tpu.pipeline_mode<synchronous>, transform_indices = @transform_3, window_bounds = array<i64: 64, 1>}, {transform_indices = @transform_4, window_bounds = array<i64: 1, 1>}, {transform_indices = @transform_5, window_bounds = array<i64: 1, 8>}]} {
    %c0 = arith.constant 0 : index
    %c0_0 = arith.constant 0 : index
    %0 = vector.load %arg1[%c0, %c0_0] : memref<8x32xf32, #tpu.memory_space<vmem>>, vector<8x32xf32>
    %cst = arith.constant 0.000000e+00 : f32
    %1 = vector.broadcast %cst : f32 to vector<1x8xf32>
    %c0_1 = arith.constant 0 : index
    %c0_2 = arith.constant 0 : index
    %2 = vector.load %arg2[%c0_1, %c0_2] : memref<64x32xf32, #tpu.memory_space<vmem>>, vector<64x32xf32>
    %c0_3 = arith.constant 0 : index
    %c0_4 = arith.constant 0 : index
    %3 = vector.load %arg3[%c0_3, %c0_4] : memref<64x1xf32, #tpu.memory_space<vmem>>, vector<64x1xf32>
    %c0_5 = arith.constant 0 : index
    %c0_6 = arith.constant 0 : index
    %4 = vector.load %arg4[%c0_5, %c0_6] : memref<64x1xf32, #tpu.memory_space<vmem>>, vector<64x1xf32>
    %cst_7 = arith.constant dense<0.000000e+00> : vector<64x8xf32>
    %5 = tpu.matmul %2, %0, %cst_7 {dimension_numbers = #tpu.dot_dimension_numbers<[1], [1], [0], [0], [0, 0, 1, 0], [], []>} : vector<64x32xf32>, vector<8x32xf32>, vector<64x8xf32> -> vector<64x8xf32>
    %6 = vector.broadcast %3 : vector<64x1xf32> to vector<64x8xf32>
    %7 = arith.addf %5, %6 : vector<64x8xf32>
    %cst_8 = arith.constant 0.000000e+00 : f32
    %8 = vector.broadcast %cst_8 : f32 to vector<64x8xf32>
    %9 = arith.maximumf %7, %8 : vector<64x8xf32>
    %10 = vector.broadcast %4 : vector<64x1xf32> to vector<64x8xf32>
    %11 = arith.mulf %9, %10 : vector<64x8xf32>
    %cst_9 = arith.constant dense<0.000000e+00> : vector<8xf32>
    %12 = vector.multi_reduction <add>, %11, %cst_9 [0] : vector<64x8xf32> to vector<8xf32>
    %13 = vector.shape_cast %12 : vector<8xf32> to vector<1x8xf32>
    %14 = arith.addf %1, %13 : vector<1x8xf32>
    %c0_10 = arith.constant 0 : index
    %c0_11 = arith.constant 0 : index
    %15 = memref.load %arg5[%c0_10, %c0_11] : memref<1x1xf32, #tpu.memory_space<smem>>
    %16 = vector.broadcast %15 : f32 to vector<1x8xf32>
    %17 = arith.addf %14, %16 : vector<1x8xf32>
    %c0_12 = arith.constant 0 : index
    %c0_13 = arith.constant 0 : index
    %18 = vector.load %arg6[%c0_12, %c0_13] : memref<1x8xf32, #tpu.memory_space<vmem>>, vector<1x8xf32>
    tpu.vector_store %arg6[%c0_12, %c0_13], %17 {strides = array<i32>} : memref<1x8xf32, #tpu.memory_space<vmem>>, vector<1x8xf32>,
    return
  }
  func.func @transform_0(%arg0: i32) -> (i32, i32) {
    %c0_i32 = arith.constant 0 : i32
    %c0_i32_0 = arith.constant 0 : i32
    return %arg0, %c0_i32 : i32, i32
  }
  func.func @transform_1(%arg0: i32) -> (i32, i32) {
    %c0_i32 = arith.constant 0 : i32
    %c0_i32_0 = arith.constant 0 : i32
    %c0_i32_1 = arith.constant 0 : i32
    return %c0_i32, %c0_i32_0 : i32, i32
  }
  func.func @transform_2(%arg0: i32) -> (i32, i32) {
    %c0_i32 = arith.constant 0 : i32
    %c0_i32_0 = arith.constant 0 : i32
    %c0_i32_1 = arith.constant 0 : i32
    return %c0_i32, %c0_i32_0 : i32, i32
  }
  func.func @transform_3(%arg0: i32) -> (i32, i32) {
    %c0_i32 = arith.constant 0 : i32
    %c0_i32_0 = arith.constant 0 : i32
    %c0_i32_1 = arith.constant 0 : i32
    return %c0_i32, %c0_i32_0 : i32, i32
  }
  func.func @transform_4(%arg0: i32) -> (i32, i32) {
    %c0_i32 = arith.constant 0 : i32
    %c0_i32_0 = arith.constant 0 : i32
    %c0_i32_1 = arith.constant 0 : i32
    return %c0_i32, %c0_i32_0 : i32, i32
  }
  func.func @transform_5(%arg0: i32) -> (i32, i32) {
    %c0_i32 = arith.constant 0 : i32
    %c0_i32_0 = arith.constant 0 : i32
    return %c0_i32, %arg0 : i32, i32
  }
}

module attributes {stable_mosaic.version = 11 : i64} {
  func.func @kernel(%arg0: i32, %arg1: memref<8x32xf32, #tpu.memory_space<vmem>>, %arg2: memref<64x32xf32, #tpu.memory_space<vmem>>, %arg3: memref<64x1xf32, #tpu.memory_space<vmem>>, %arg4: memref<64x1xf32, #tpu.memory_space<vmem>>, %arg5: memref<1x1xf32, #tpu.memory_space<smem>>, %arg6: memref<1x8xf32, #tpu.memory_space<vmem>>) attributes {dimension_semantics = [#tpu.dimension_semantics<parallel>], iteration_bounds = array<i64: 1>, scalar_prefetch = 0 : i64, scratch_operands = 0 : i64, tpu.core_type = #tpu.core_type<tc>, window_params = [{transform_indices = @transform_0, window_bounds = array<i64: 8, 32>}, {pipeline_mode = #tpu.pipeline_mode<synchronous>, transform_indices = @transform_1, window_bounds = array<i64: 64, 32>}, {pipeline_mode = #tpu.pipeline_mode<synchronous>, transform_indices = @transform_2, window_bounds = array<i64: 64, 1>}, {pipeline_mode = #tpu.pipeline_mode<synchronous>, transform_indices = @transform_3, window_bounds = array<i64: 64, 1>}, {transform_indices = @transform_4, window_bounds = array<i64: 1, 1>}, {transform_indices = @transform_5, window_bounds = array<i64: 1, 8>}]} {
    %c0 = arith.constant 0 : index
    %c0_0 = arith.constant 0 : index
    %0 = vector.load %arg1[%c0, %c0_0] : memref<8x32xf32, #tpu.memory_space<vmem>>, vector<8x32xf32>
    %cst = arith.constant 0.000000e+00 : f32
    %1 = vector.broadcast %cst : f32 to vector<1x8xf32>
    %c0_1 = arith.constant 0 : index
    %c0_2 = arith.constant 0 : index
    %2 = vector.load %arg2[%c0_1, %c0_2] : memref<64x32xf32, #tpu.memory_space<vmem>>, vector<64x32xf32>
    %c0_3 = arith.constant 0 : index
    %c0_4 = arith.constant 0 : index
    %3 = vector.load %arg3[%c0_3, %c0_4] : memref<64x1xf32, #tpu.memory_space<vmem>>, vector<64x1xf32>
    %c0_5 = arith.constant 0 : index
    %c0_6 = arith.constant 0 : index
    %4 = vector.load %arg4[%c0_5, %c0_6] : memref<64x1xf32, #tpu.memory_space<vmem>>, vector<64x1xf32>
    %cst_7 = arith.constant dense<0.000000e+00> : vector<64x8xf32>
    %5 = tpu.matmul %2, %0, %cst_7 {dimension_numbers = #tpu.dot_dimension_numbers<[1], [1], [0], [0], [0, 0, 1, 0], [], []>} : vector<64x32xf32>, vector<8x32xf32>, vector<64x8xf32> -> vector<64x8xf32>
    %6 = vector.broadcast %3 : vector<64x1xf32> to vector<64x8xf32>
    %7 = arith.addf %5, %6 : vector<64x8xf32>
    %cst_8 = arith.constant 0.000000e+00 : f32
    %8 = vector.broadcast %cst_8 : f32 to vector<64x8xf32>
    %9 = arith.maximumf %7, %8 : vector<64x8xf32>
    %10 = vector.broadcast %4 : vector<64x1xf32> to vector<64x8xf32>
    %11 = arith.mulf %9, %10 : vector<64x8xf32>
    %cst_9 = arith.constant dense<0.000000e+00> : vector<8xf32>
    %12 = vector.multi_reduction <add>, %11, %cst_9 [0] : vector<64x8xf32> to vector<8xf32>
    %13 = vector.shape_cast %12 : vector<8xf32> to vector<1x8xf32>
    %14 = arith.addf %1, %13 : vector<1x8xf32>
    %c0_10 = arith.constant 0 : index
    %c0_11 = arith.constant 0 : index
    %15 = memref.load %arg5[%c0_10, %c0_11] : memref<1x1xf32, #tpu.memory_space<smem>>
    %16 = vector.broadcast %15 : f32 to vector<1x8xf32>
    %17 = arith.addf %14, %16 : vector<1x8xf32>
    %c0_12 = arith.constant 0 : index
    %c0_13 = arith.constant 0 : index
    %18 = vector.load %arg6[%c0_12, %c0_13] : memref<1x8xf32, #tpu.memory_space<vmem>>, vector<1x8xf32>
    tpu.vector_store %arg6[%c0_12, %c0_13], %17 {strides = array<i32>} : memref<1x8xf32, #tpu.memory_space<vmem>>, vector<1x8xf32>,
    return
  }
  func.func @transform_0(%arg0: i32) -> (i32, i32) {
    %c0_i32 = arith.constant 0 : i32
    %c0_i32_0 = arith.constant 0 : i32
    return %arg0, %c0_i32 : i32, i32
  }
  func.func @transform_1(%arg0: i32) -> (i32, i32) {
    %c0_i32 = arith.constant 0 : i32
    %c0_i32_0 = arith.constant 0 : i32
    %c0_i32_1 = arith.constant 0 : i32
    return %c0_i32, %c0_i32_0 : i32, i32
  }
  func.func @transform_2(%arg0: i32) -> (i32, i32) {
    %c0_i32 = arith.constant 0 : i32
    %c0_i32_0 = arith.constant 0 : i32
    %c0_i32_1 = arith.constant 0 : i32
    return %c0_i32, %c0_i32_0 : i32, i32
  }
  func.func @transform_3(%arg0: i32) -> (i32, i32) {
    %c0_i32 = arith.constant 0 : i32
    %c0_i32_0 = arith.constant 0 : i32
    %c0_i32_1 = arith.constant 0 : i32
    return %c0_i32, %c0_i32_0 : i32, i32
  }
  func.func @transform_4(%arg0: i32) -> (i32, i32) {
    %c0_i32 = arith.constant 0 : i32
    %c0_i32_0 = arith.constant 0 : i32
    %c0_i32_1 = arith.constant 0 : i32
    return %c0_i32, %c0_i32_0 : i32, i32
  }
  func.func @transform_5(%arg0: i32) -> (i32, i32) {
    %c0_i32 = arith.constant 0 : i32
    %c0_i32_0 = arith.constant 0 : i32
    return %c0_i32, %arg0 : i32, i32
  }
}

</mosaic_0001>

<llo_original>
// kernel: tpu_custom_call.1
$region0: #{tpu_custom_call.1}
  #allocation0 [shape = 'u32[]', space=smem, size = 0x4, offset = 0x4, fixed_abs, tag = 'smem constant byte address 0x4 - core index']
  #allocation1 [shape = 'u32[144,128]{1,0:T(1,128)}', space=vmem, size = 0x12000, scoped, tag = 'internal scratch']
  #allocation2 [shape = 'f32[1,1]{1,0:T(1,128)S(6)}', space=smem, size = 0x200, scoped, tag = 'scoped memory for tpu_custom_call.1']
  %s0 = inlined_call_operand.vmem [shape: f32[8,32], index: 0, kind: input, shape index: {}]
  %s1 = inlined_call_operand.vmem [shape: f32[64,32], index: 1, kind: input, shape index: {}]
  %s2 = inlined_call_operand.vmem [shape: f32[64,1], index: 2, kind: input, shape index: {}]
  %s3 = inlined_call_operand.vmem [shape: f32[64,1], index: 3, kind: input, shape index: {}]
  %s4 = inlined_call_operand.<no memory space> [shape: f32[1,1], index: 4, kind: input, shape index: {}]
  %s5 = inlined_call_operand.hbm [shape: f32[1,8], index: 5, kind: output, shape index: {}]
  %s6 = sld [smem:[#allocation0]]
  $region30: #{tpu_custom_call.1} parent=0
    _
  %s8 = ssub.s32 1, %s6
  %s9 = scalar_select 0, %s8, %s6
  %10 = sst [smem:[#allocation2]] %s4
  $region1: #{tpu_custom_call.1} parent=0
    #allocation3 [shape = 'u8[512]{0}', space=vmem, size = 0x400, scoped, tag = 'output window, operand 0, single buffered']
    #allocation4 [shape = 's32[1]{0}', space=sflag, size = 0x4, scoped, tag = 'scoped memory for tpu_custom_call.1']
    %11 = vsyncpa [#allocation4], 0
    // Predicated region
    $region2: #{tpu_custom_call.1} parent=1 // pred_check
      _
    $region3: #{tpu_custom_call.1} parent=1 // pred_check_branch
      %13 = sbr.rel (0) target = $region5
    $region4: #{tpu_custom_call.1} parent=1 // pred_region
      _
    $region5: #{tpu_custom_call.1} parent=1 // pred_fallthru
      _
    // Predicated region
    $region6: #{tpu_custom_call.1} parent=1 // pred_check
      _
    $region7: #{tpu_custom_call.1} parent=1 // pred_check_branch
      %15 = sbr.rel (0) target = $region9
    $region8: #{tpu_custom_call.1} parent=1 // pred_region
      _
    $region9: #{tpu_custom_call.1} parent=1 // pred_fallthru
      _
    // Predicated region
    $region10: #{tpu_custom_call.1} parent=1 // pred_check
      _
    $region11: #{tpu_custom_call.1} parent=1 // pred_check_branch
      %17 = sbr.rel (0) target = $region13
    $region12: #{tpu_custom_call.1} parent=1 // pred_region
      _
    $region13: #{tpu_custom_call.1} parent=1 // pred_fallthru
      _
    // Predicated region
    $region14: #{tpu_custom_call.1} parent=1 // pred_check
      _
    $region15: #{tpu_custom_call.1} parent=1 // pred_check_branch
      %19 = sbr.rel (0) target = $region17
    $region16: #{tpu_custom_call.1} parent=1 // pred_region
      _
    $region17: #{tpu_custom_call.1} parent=1 // pred_fallthru
      _
    // Predicated region
    $region18: #{tpu_custom_call.1} parent=1 // pred_check
      _
    $region19: #{tpu_custom_call.1} parent=1 // pred_check_branch
      %21 = sbr.rel (0) target = $region21
    $region20: #{tpu_custom_call.1} parent=1 // pred_region
      _
    $region21: #{tpu_custom_call.1} parent=1 // pred_fallthru
      _
    %v22 = vld [vmem:[%s0] sm:$0xff]
    %v23 = vld [vmem:[%s1] sm:$0xff]
    %v24 = vld [vmem:[%s1 + $0x8] sm:$0xff]
    %v25 = vld [vmem:[%s1 + $0x10] sm:$0xff]
    %v26 = vld [vmem:[%s1 + $0x18] sm:$0xff]
    %v27 = vld [vmem:[%s1 + $0x20] sm:$0xff]
    %v28 = vld [vmem:[%s1 + $0x28] sm:$0xff]
    %v29 = vld [vmem:[%s1 + $0x30] sm:$0xff]
    %v30 = vld [vmem:[%s1 + $0x38] sm:$0xff]
    %v31 = vld [vmem:[%s2] sm:$0xff]
    %v32 = vld [vmem:[%s2 + $0x8] sm:$0xff]
    %v33 = vld [vmem:[%s2 + $0x10] sm:$0xff]
    %v34 = vld [vmem:[%s2 + $0x18] sm:$0xff]
    %v35 = vld [vmem:[%s2 + $0x20] sm:$0xff]
    %v36 = vld [vmem:[%s2 + $0x28] sm:$0xff]
    %v37 = vld [vmem:[%s2 + $0x30] sm:$0xff]
    %v38 = vld [vmem:[%s2 + $0x38] sm:$0xff]
    %v39 = vld [vmem:[%s3] sm:$0xff]
    %v40 = vld [vmem:[%s3 + $0x8] sm:$0xff]
    %v41 = vld [vmem:[%s3 + $0x10] sm:$0xff]
    %v42 = vld [vmem:[%s3 + $0x18] sm:$0xff]
    %v43 = vld [vmem:[%s3 + $0x20] sm:$0xff]
    %v44 = vld [vmem:[%s3 + $0x28] sm:$0xff]
    %v45 = vld [vmem:[%s3 + $0x30] sm:$0xff]
    %v46 = vld [vmem:[%s3 + $0x38] sm:$0xff]
    %48 = vset.pattern.permute.xlu0 0
    %49 = vperm.xlu0 %48, %v31
    %v50 = vpop.permute.xlu0 %49
    %53 = vset.pattern.permute.xlu0 0
    %54 = vperm.xlu0 %53, %v32
    %v55 = vpop.permute.xlu0 %54
    %58 = vset.pattern.permute.xlu0 0
    %59 = vperm.xlu0 %58, %v33
    %v60 = vpop.permute.xlu0 %59
    %63 = vset.pattern.permute.xlu0 0
    %64 = vperm.xlu0 %63, %v34
    %v65 = vpop.permute.xlu0 %64
    %68 = vset.pattern.permute.xlu0 0
    %69 = vperm.xlu0 %68, %v35
    %v70 = vpop.permute.xlu0 %69
    %73 = vset.pattern.permute.xlu0 0
    %74 = vperm.xlu0 %73, %v36
    %v75 = vpop.permute.xlu0 %74
    %78 = vset.pattern.permute.xlu0 0
    %79 = vperm.xlu0 %78, %v37
    %v80 = vpop.permute.xlu0 %79
    %83 = vset.pattern.permute.xlu0 0
    %84 = vperm.xlu0 %83, %v38
    %v85 = vpop.permute.xlu0 %84
    %vm87 = vcmask 261120
    %v89 = vsel %vm87, %v23, 0
    %v92 = vsel %vm87, %v24, 0
    %v95 = vsel %vm87, %v25, 0
    %v98 = vsel %vm87, %v26, 0
    %v101 = vsel %vm87, %v27, 0
    %v104 = vsel %vm87, %v28, 0
    %v107 = vsel %vm87, %v29, 0
    %v110 = vsel %vm87, %v30, 0
    %v113 = vsel %vm87, %v22, 0
    %115 = vmatprep.subr.mxu0 0.0
    %116 = vmatpush1.xpose.msra.mxu0 0.0
    %117 = vmatprep.subr.mxu0 0.0
    %118 = vmatpush1.xpose.msra.mxu0 0.0
    %119 = vmatprep.subr.mxu0 0.0
    %120 = vmatpush1.xpose.msra.mxu0 0.0
    %121 = vmatprep.subr.mxu0 0.0
    %122 = vmatpush1.xpose.msra.mxu0 0.0
    %123 = vmatprep.subr.mxu0 0.0
    %124 = vmatpush1.xpose.msra.mxu0 0.0
    %125 = vmatprep.subr.mxu0 0.0
    %126 = vmatpush1.xpose.msra.mxu0 0.0
    %127 = vmatprep.subr.mxu0 0.0
    %128 = vmatpush1.xpose.msra.mxu0 0.0
    %129 = vmatprep.subr.mxu0 0.0
    %130 = vmatpush1.xpose.msra.mxu0 0.0
    %131 = vmatprep.subr.mxu0 0.0
    %132 = vmatpush1.xpose.msra.mxu0 0.0
    %133 = vmatprep.subr.mxu0 0.0
    %134 = vmatpush1.xpose.msra.mxu0 0.0
    %135 = vmatprep.subr.mxu0 0.0
    %136 = vmatpush1.xpose.msra.mxu0 0.0
    %137 = vmatprep.subr.mxu0 0.0
    %138 = vmatpush1.xpose.msra.mxu0 0.0
    %139 = vmatprep.subr.mxu0 0.0
    %140 = vmatpush1.xpose.msra.mxu0 0.0
    %141 = vmatprep.subr.mxu0 0.0
    %142 = vmatpush1.xpose.msra.mxu0 0.0
    %143 = vmatprep.subr.mxu0 0.0
    %144 = vmatpush1.xpose.msra.mxu0 0.0
    %145 = vmatprep.subr.mxu0 0.0
    %146 = vmatpush1.xpose.msra.mxu0 %v113
    %147 = vmatprep.subr.mxu0 0.0
    %148 = vmatpush2.xpose.msra.mxu0 0.0
    %149 = vmatprep.subr.mxu0 0.0
    %150 = vmatpush2.xpose.msra.mxu0 0.0
    %151 = vmatprep.subr.mxu0 0.0
    %152 = vmatpush2.xpose.msra.mxu0 0.0
    %153 = vmatprep.subr.mxu0 0.0
    %154 = vmatpush2.xpose.msra.mxu0 0.0
    %155 = vmatprep.subr.mxu0 0.0
    %156 = vmatpush2.xpose.msra.mxu0 0.0
    %157 = vmatprep.subr.mxu0 0.0
    %158 = vmatpush2.xpose.msra.mxu0 0.0
    %159 = vmatprep.subr.mxu0 0.0
    %160 = vmatpush2.xpose.msra.mxu0 0.0
    %161 = vmatprep.subr.mxu0 0.0
    %162 = vmatpush2.xpose.msra.mxu0 0.0
    %163 = vmatprep.subr.mxu0 0.0
    %164 = vmatpush2.xpose.msra.mxu0 0.0
    %165 = vmatprep.subr.mxu0 0.0
    %166 = vmatpush2.xpose.msra.mxu0 0.0
    %167 = vmatprep.subr.mxu0 0.0
    %168 = vmatpush2.xpose.msra.mxu0 0.0
    %169 = vmatprep.subr.mxu0 0.0
    %170 = vmatpush2.xpose.msra.mxu0 0.0
    %171 = vmatprep.subr.mxu0 0.0
    %172 = vmatpush2.xpose.msra.mxu0 0.0
    %173 = vmatprep.subr.mxu0 0.0
    %174 = vmatpush2.xpose.msra.mxu0 0.0
    %175 = vmatprep.subr.mxu0 0.0
    %176 = vmatpush2.xpose.msra.mxu0 0.0
    %177 = vmatprep.subr.mxu0 0.0
    %178 = vmatpush2.xpose.msra.mxu0 0.0
    %179 = vmatprep.mubr.f32.mxu0 0.0
    %180 = vmatmul.mubr.f32.gmra.mxu0 %v89
    %v181 = vpop.f32.mrf.mxu0
    %v182 = vadd.f32 %v50, %v181
    %v183 = vpop.f32.mrf.mxu0
    %184 = vmatprep.mubr.f32.mxu0 0.0
    %185 = vmatmul.mubr.f32.gmra.mxu0 %v92
    %v186 = vpop.f32.mrf.mxu0
    %v187 = vadd.f32 %v55, %v186
    %v188 = vpop.f32.mrf.mxu0
    %189 = vmatprep.mubr.f32.mxu0 0.0
    %190 = vmatmul.mubr.f32.gmra.mxu0 %v95
    %v191 = vpop.f32.mrf.mxu0
    %v192 = vadd.f32 %v60, %v191
    %v193 = vpop.f32.mrf.mxu0
    %194 = vmatprep.mubr.f32.mxu0 0.0
    %195 = vmatmul.mubr.f32.gmra.mxu0 %v98
    %v196 = vpop.f32.mrf.mxu0
    %v197 = vadd.f32 %v65, %v196
    %v198 = vpop.f32.mrf.mxu0
    %199 = vmatprep.mubr.f32.mxu0 0.0
    %200 = vmatmul.mubr.f32.gmra.mxu0 %v101
    %v201 = vpop.f32.mrf.mxu0
    %v202 = vadd.f32 %v70, %v201
    %v203 = vpop.f32.mrf.mxu0
    %204 = vmatprep.mubr.f32.mxu0 0.0
    %205 = vmatmul.mubr.f32.gmra.mxu0 %v104
    %v206 = vpop.f32.mrf.mxu0
    %v207 = vadd.f32 %v75, %v206
    %v208 = vpop.f32.mrf.mxu0
    %209 = vmatprep.mubr.f32.mxu0 0.0
    %210 = vmatmul.mubr.f32.gmra.mxu0 %v107
    %v211 = vpop.f32.mrf.mxu0
    %v212 = vadd.f32 %v80, %v211
    %v213 = vpop.f32.mrf.mxu0
    %214 = vmatprep.mubr.f32.mxu0 0.0
    %215 = vmatmul.mubr.f32.gmra.mxu0 %v110
    %v216 = vpop.f32.mrf.mxu0
    %v217 = vadd.f32 %v85, %v216
    %v218 = vpop.f32.mrf.mxu0
    %219 = vdwg.mxu0
    %v220 = vmax.f32 %v182, 0.0
    %v221 = vmax.f32 %v187, 0.0
    %v222 = vmax.f32 %v192, 0.0
    %v223 = vmax.f32 %v197, 0.0
    %v224 = vmax.f32 %v202, 0.0
    %v225 = vmax.f32 %v207, 0.0
    %v226 = vmax.f32 %v212, 0.0
    %v227 = vmax.f32 %v217, 0.0
    %229 = vset.pattern.permute.xlu0 0
    %230 = vperm.xlu0 %229, %v39
    %v231 = vpop.permute.xlu0 %230
    %234 = vset.pattern.permute.xlu0 0
    %235 = vperm.xlu0 %234, %v40
    %v236 = vpop.permute.xlu0 %235
    %239 = vset.pattern.permute.xlu0 0
    %240 = vperm.xlu0 %239, %v41
    %v241 = vpop.permute.xlu0 %240
    %244 = vset.pattern.permute.xlu0 0
    %245 = vperm.xlu0 %244, %v42
    %v246 = vpop.permute.xlu0 %245
    %249 = vset.pattern.permute.xlu0 0
    %250 = vperm.xlu0 %249, %v43
    %v251 = vpop.permute.xlu0 %250
    %254 = vset.pattern.permute.xlu0 0
    %255 = vperm.xlu0 %254, %v44
    %v256 = vpop.permute.xlu0 %255
    %259 = vset.pattern.permute.xlu0 0
    %260 = vperm.xlu0 %259, %v45
    %v261 = vpop.permute.xlu0 %260
    %264 = vset.pattern.permute.xlu0 0
    %265 = vperm.xlu0 %264, %v46
    %v266 = vpop.permute.xlu0 %265
    %v268 = vmul.f32 %v220, %v231
    %v269 = vmul.f32 %v221, %v236
    %v270 = vmul.f32 %v222, %v241
    %v271 = vmul.f32 %v223, %v246
    %v272 = vmul.f32 %v224, %v251
    %v273 = vmul.f32 %v225, %v256
    %v274 = vmul.f32 %v226, %v261
    %v275 = vmul.f32 %v227, %v266
    %vm276 = vcmask 64512
    %v277 = vsel %vm276, %v268, 0.0
    %v278 = vsel %vm276, %v269, 0.0
    %v279 = vadd.f32 %v277, %v278
    %v280 = vsel %vm276, %v270, 0.0
    %v281 = vadd.f32 %v279, %v280
    %v282 = vsel %vm276, %v271, 0.0
    %v283 = vadd.f32 %v281, %v282
    %v284 = vsel %vm276, %v272, 0.0
    %v285 = vadd.f32 %v283, %v284
    %v286 = vsel %vm276, %v273, 0.0
    %v287 = vadd.f32 %v285, %v286
    %v288 = vsel %vm276, %v274, 0.0
    %v289 = vadd.f32 %v287, %v288
    %v290 = vsel %vm276, %v275, 0.0
    %v291 = vadd.f32 %v289, %v290
    %v292 = vrot.slane %v291, 4
    %v293 = vadd.f32 %v291, %v292
    %v294 = vrot.slane %v293, 2
    %v295 = vadd.f32 %v293, %v294
    %v296 = vrot.slane %v295, 1
    %v297 = vadd.f32 %v295, %v296
    %v298 = vadd.f32 %v297, 0.0
    %s299 = sld [smem:[#allocation2]]
    %v300 = vstv %s299
    %v301 = vadd.f32 %v298, %v300
    %vm302 = vcmask 57344
    %303 = vst.msk [vmem:[#allocation3] sm:$0x1] %vm302, %v301
    // Predicated region
    $region22: #{tpu_custom_call.1} parent=1 // pred_check
      _
    $region23: #{tpu_custom_call.1} parent=1 // pred_check_branch
      %305 = sbr.rel (0) target = $region25
    $region24: #{tpu_custom_call.1} parent=1 // pred_region
      %s307 = ssub.s32 16, 16
      %308 = vsyncadd [#allocation4], %s307
      %s310 = sshll.u32 [#allocation3], 4
      %s311 = int_to_ptr.vmem [resolvable:$true] %s310
      %313 = dma.vmem_to_hbm [thread:$0]  %s311, 16, %s5, [#allocation4]
    $region25: #{tpu_custom_call.1} parent=1 // pred_fallthru
      _
    // Predicated region
    $region26: #{tpu_custom_call.1} parent=1 // pred_check
      _
    $region27: #{tpu_custom_call.1} parent=1 // pred_check_branch
      %315 = sbr.rel (0) target = $region29
    $region28: #{tpu_custom_call.1} parent=1 // pred_region
      %316 = dma.done [#allocation4], 16
    $region29: #{tpu_custom_call.1} parent=1 // pred_fallthru
      _
    %317 = vsyncpa [#allocation4], 1

// kernel: tpu_custom_call.1
$region0: #{tpu_custom_call.1}
  #allocation0 [shape = 'u32[]', space=smem, size = 0x4, offset = 0x4, fixed_abs, tag = 'smem constant byte address 0x4 - core index']
  #allocation1 [shape = 'u32[144,128]{1,0:T(1,128)}', space=vmem, size = 0x12000, scoped, tag = 'internal scratch']
  #allocation2 [shape = 'f32[1,1]{1,0:T(1,128)S(6)}', space=smem, size = 0x200, scoped, tag = 'scoped memory for tpu_custom_call.1']
  %s0 = inlined_call_operand.vmem [shape: f32[8,32], index: 0, kind: input, shape index: {}]
  %s1 = inlined_call_operand.vmem [shape: f32[64,32], index: 1, kind: input, shape index: {}]
  %s2 = inlined_call_operand.vmem [shape: f32[64,1], index: 2, kind: input, shape index: {}]
  %s3 = inlined_call_operand.vmem [shape: f32[64,1], index: 3, kind: input, shape index: {}]
  %s4 = inlined_call_operand.<no memory space> [shape: f32[1,1], index: 4, kind: input, shape index: {}]
  %s5 = inlined_call_operand.hbm [shape: f32[1,8], index: 5, kind: output, shape index: {}]
  %s6 = sld [smem:[#allocation0]]
  $region30: #{tpu_custom_call.1} parent=0
    _
  %s8 = ssub.s32 1, %s6
  %s9 = scalar_select 0, %s8, %s6
  %10 = sst [smem:[#allocation2]] %s4
  $region1: #{tpu_custom_call.1} parent=0
    #allocation3 [shape = 'u8[512]{0}', space=vmem, size = 0x400, scoped, tag = 'output window, operand 0, single buffered']
    #allocation4 [shape = 's32[1]{0}', space=sflag, size = 0x4, scoped, tag = 'scoped memory for tpu_custom_call.1']
    %11 = vsyncpa [#allocation4], 0
    // Predicated region
    $region2: #{tpu_custom_call.1} parent=1 // pred_check
      _
    $region3: #{tpu_custom_call.1} parent=1 // pred_check_branch
      %13 = sbr.rel (0) target = $region5
    $region4: #{tpu_custom_call.1} parent=1 // pred_region
      _
    $region5: #{tpu_custom_call.1} parent=1 // pred_fallthru
      _
    // Predicated region
    $region6: #{tpu_custom_call.1} parent=1 // pred_check
      _
    $region7: #{tpu_custom_call.1} parent=1 // pred_check_branch
      %15 = sbr.rel (0) target = $region9
    $region8: #{tpu_custom_call.1} parent=1 // pred_region
      _
    $region9: #{tpu_custom_call.1} parent=1 // pred_fallthru
      _
    // Predicated region
    $region10: #{tpu_custom_call.1} parent=1 // pred_check
      _
    $region11: #{tpu_custom_call.1} parent=1 // pred_check_branch
      %17 = sbr.rel (0) target = $region13
    $region12: #{tpu_custom_call.1} parent=1 // pred_region
      _
    $region13: #{tpu_custom_call.1} parent=1 // pred_fallthru
      _
    // Predicated region
    $region14: #{tpu_custom_call.1} parent=1 // pred_check
      _
    $region15: #{tpu_custom_call.1} parent=1 // pred_check_branch
      %19 = sbr.rel (0) target = $region17
    $region16: #{tpu_custom_call.1} parent=1 // pred_region
      _
    $region17: #{tpu_custom_call.1} parent=1 // pred_fallthru
      _
    // Predicated region
    $region18: #{tpu_custom_call.1} parent=1 // pred_check
      _
    $region19: #{tpu_custom_call.1} parent=1 // pred_check_branch
      %21 = sbr.rel (0) target = $region21
    $region20: #{tpu_custom_call.1} parent=1 // pred_region
      _
    $region21: #{tpu_custom_call.1} parent=1 // pred_fallthru
      _
    %v22 = vld [vmem:[%s0] sm:$0xff]
    %v23 = vld [vmem:[%s1] sm:$0xff]
    %v24 = vld [vmem:[%s1 + $0x8] sm:$0xff]
    %v25 = vld [vmem:[%s1 + $0x10] sm:$0xff]
    %v26 = vld [vmem:[%s1 + $0x18] sm:$0xff]
    %v27 = vld [vmem:[%s1 + $0x20] sm:$0xff]
    %v28 = vld [vmem:[%s1 + $0x28] sm:$0xff]
    %v29 = vld [vmem:[%s1 + $0x30] sm:$0xff]
    %v30 = vld [vmem:[%s1 + $0x38] sm:$0xff]
    %v31 = vld [vmem:[%s2] sm:$0xff]
    %v32 = vld [vmem:[%s2 + $0x8] sm:$0xff]
    %v33 = vld [vmem:[%s2 + $0x10] sm:$0xff]
    %v34 = vld [vmem:[%s2 + $0x18] sm:$0xff]
    %v35 = vld [vmem:[%s2 + $0x20] sm:$0xff]
    %v36 = vld [vmem:[%s2 + $0x28] sm:$0xff]
    %v37 = vld [vmem:[%s2 + $0x30] sm:$0xff]
    %v38 = vld [vmem:[%s2 + $0x38] sm:$0xff]
    %v39 = vld [vmem:[%s3] sm:$0xff]
    %v40 = vld [vmem:[%s3 + $0x8] sm:$0xff]
    %v41 = vld [vmem:[%s3 + $0x10] sm:$0xff]
    %v42 = vld [vmem:[%s3 + $0x18] sm:$0xff]
    %v43 = vld [vmem:[%s3 + $0x20] sm:$0xff]
    %v44 = vld [vmem:[%s3 + $0x28] sm:$0xff]
    %v45 = vld [vmem:[%s3 + $0x30] sm:$0xff]
    %v46 = vld [vmem:[%s3 + $0x38] sm:$0xff]
    %48 = vset.pattern.permute.xlu0 0
    %49 = vperm.xlu0 %48, %v31
    %v50 = vpop.permute.xlu0 %49
    %53 = vset.pattern.permute.xlu0 0
    %54 = vperm.xlu0 %53, %v32
    %v55 = vpop.permute.xlu0 %54
    %58 = vset.pattern.permute.xlu0 0
    %59 = vperm.xlu0 %58, %v33
    %v60 = vpop.permute.xlu0 %59
    %63 = vset.pattern.permute.xlu0 0
    %64 = vperm.xlu0 %63, %v34
    %v65 = vpop.permute.xlu0 %64
    %68 = vset.pattern.permute.xlu0 0
    %69 = vperm.xlu0 %68, %v35
    %v70 = vpop.permute.xlu0 %69
    %73 = vset.pattern.permute.xlu0 0
    %74 = vperm.xlu0 %73, %v36
    %v75 = vpop.permute.xlu0 %74
    %78 = vset.pattern.permute.xlu0 0
    %79 = vperm.xlu0 %78, %v37
    %v80 = vpop.permute.xlu0 %79
    %83 = vset.pattern.permute.xlu0 0
    %84 = vperm.xlu0 %83, %v38
    %v85 = vpop.permute.xlu0 %84
    %vm87 = vcmask 261120
    %v89 = vsel %vm87, %v23, 0
    %v92 = vsel %vm87, %v24, 0
    %v95 = vsel %vm87, %v25, 0
    %v98 = vsel %vm87, %v26, 0
    %v101 = vsel %vm87, %v27, 0
    %v104 = vsel %vm87, %v28, 0
    %v107 = vsel %vm87, %v29, 0
    %v110 = vsel %vm87, %v30, 0
    %v113 = vsel %vm87, %v22, 0
    %115 = vmatprep.subr.mxu0 0.0
    %116 = vmatpush1.xpose.msra.mxu0 0.0
    %117 = vmatprep.subr.mxu0 0.0
    %118 = vmatpush1.xpose.msra.mxu0 0.0
    %119 = vmatprep.subr.mxu0 0.0
    %120 = vmatpush1.xpose.msra.mxu0 0.0
    %121 = vmatprep.subr.mxu0 0.0
    %122 = vmatpush1.xpose.msra.mxu0 0.0
    %123 = vmatprep.subr.mxu0 0.0
    %124 = vmatpush1.xpose.msra.mxu0 0.0
    %125 = vmatprep.subr.mxu0 0.0
    %126 = vmatpush1.xpose.msra.mxu0 0.0
    %127 = vmatprep.subr.mxu0 0.0
    %128 = vmatpush1.xpose.msra.mxu0 0.0
    %129 = vmatprep.subr.mxu0 0.0
    %130 = vmatpush1.xpose.msra.mxu0 0.0
    %131 = vmatprep.subr.mxu0 0.0
    %132 = vmatpush1.xpose.msra.mxu0 0.0
    %133 = vmatprep.subr.mxu0 0.0
    %134 = vmatpush1.xpose.msra.mxu0 0.0
    %135 = vmatprep.subr.mxu0 0.0
    %136 = vmatpush1.xpose.msra.mxu0 0.0
    %137 = vmatprep.subr.mxu0 0.0
    %138 = vmatpush1.xpose.msra.mxu0 0.0
    %139 = vmatprep.subr.mxu0 0.0
    %140 = vmatpush1.xpose.msra.mxu0 0.0
    %141 = vmatprep.subr.mxu0 0.0
    %142 = vmatpush1.xpose.msra.mxu0 0.0
    %143 = vmatprep.subr.mxu0 0.0
    %144 = vmatpush1.xpose.msra.mxu0 0.0
    %145 = vmatprep.subr.mxu0 0.0
    %146 = vmatpush1.xpose.msra.mxu0 %v113
    %147 = vmatprep.subr.mxu0 0.0
    %148 = vmatpush2.xpose.msra.mxu0 0.0
    %149 = vmatprep.subr.mxu0 0.0
    %150 = vmatpush2.xpose.msra.mxu0 0.0
    %151 = vmatprep.subr.mxu0 0.0
    %152 = vmatpush2.xpose.msra.mxu0 0.0
    %153 = vmatprep.subr.mxu0 0.0
    %154 = vmatpush2.xpose.msra.mxu0 0.0
    %155 = vmatprep.subr.mxu0 0.0
    %156 = vmatpush2.xpose.msra.mxu0 0.0
    %157 = vmatprep.subr.mxu0 0.0
    %158 = vmatpush2.xpose.msra.mxu0 0.0
    %159 = vmatprep.subr.mxu0 0.0
    %160 = vmatpush2.xpose.msra.mxu0 0.0
    %161 = vmatprep.subr.mxu0 0.0
    %162 = vmatpush2.xpose.msra.mxu0 0.0
    %163 = vmatprep.subr.mxu0 0.0
    %164 = vmatpush2.xpose.msra.mxu0 0.0
    %165 = vmatprep.subr.mxu0 0.0
    %166 = vmatpush2.xpose.msra.mxu0 0.0
    %167 = vmatprep.subr.mxu0 0.0
    %168 = vmatpush2.xpose.msra.mxu0 0.0
    %169 = vmatprep.subr.mxu0 0.0
    %170 = vmatpush2.xpose.msra.mxu0 0.0
    %171 = vmatprep.subr.mxu0 0.0
    %172 = vmatpush2.xpose.msra.mxu0 0.0
    %173 = vmatprep.subr.mxu0 0.0
    %174 = vmatpush2.xpose.msra.mxu0 0.0
    %175 = vmatprep.subr.mxu0 0.0
    %176 = vmatpush2.xpose.msra.mxu0 0.0
    %177 = vmatprep.subr.mxu0 0.0
    %178 = vmatpush2.xpose.msra.mxu0 0.0
    %179 = vmatprep.mubr.f32.mxu0 0.0
    %180 = vmatmul.mubr.f32.gmra.mxu0 %v89
    %v181 = vpop.f32.mrf.mxu0
    %v182 = vadd.f32 %v50, %v181
    %v183 = vpop.f32.mrf.mxu0
    %184 = vmatprep.mubr.f32.mxu0 0.0
    %185 = vmatmul.mubr.f32.gmra.mxu0 %v92
    %v186 = vpop.f32.mrf.mxu0
    %v187 = vadd.f32 %v55, %v186
    %v188 = vpop.f32.mrf.mxu0
    %189 = vmatprep.mubr.f32.mxu0 0.0
    %190 = vmatmul.mubr.f32.gmra.mxu0 %v95
    %v191 = vpop.f32.mrf.mxu0
    %v192 = vadd.f32 %v60, %v191
    %v193 = vpop.f32.mrf.mxu0
    %194 = vmatprep.mubr.f32.mxu0 0.0
    %195 = vmatmul.mubr.f32.gmra.mxu0 %v98
    %v196 = vpop.f32.mrf.mxu0
    %v197 = vadd.f32 %v65, %v196
    %v198 = vpop.f32.mrf.mxu0
    %199 = vmatprep.mubr.f32.mxu0 0.0
    %200 = vmatmul.mubr.f32.gmra.mxu0 %v101
    %v201 = vpop.f32.mrf.mxu0
    %v202 = vadd.f32 %v70, %v201
    %v203 = vpop.f32.mrf.mxu0
    %204 = vmatprep.mubr.f32.mxu0 0.0
    %205 = vmatmul.mubr.f32.gmra.mxu0 %v104
    %v206 = vpop.f32.mrf.mxu0
    %v207 = vadd.f32 %v75, %v206
    %v208 = vpop.f32.mrf.mxu0
    %209 = vmatprep.mubr.f32.mxu0 0.0
    %210 = vmatmul.mubr.f32.gmra.mxu0 %v107
    %v211 = vpop.f32.mrf.mxu0
    %v212 = vadd.f32 %v80, %v211
    %v213 = vpop.f32.mrf.mxu0
    %214 = vmatprep.mubr.f32.mxu0 0.0
    %215 = vmatmul.mubr.f32.gmra.mxu0 %v110
    %v216 = vpop.f32.mrf.mxu0
    %v217 = vadd.f32 %v85, %v216
    %v218 = vpop.f32.mrf.mxu0
    %219 = vdwg.mxu0
    %v220 = vmax.f32 %v182, 0.0
    %v221 = vmax.f32 %v187, 0.0
    %v222 = vmax.f32 %v192, 0.0
    %v223 = vmax.f32 %v197, 0.0
    %v224 = vmax.f32 %v202, 0.0
    %v225 = vmax.f32 %v207, 0.0
    %v226 = vmax.f32 %v212, 0.0
    %v227 = vmax.f32 %v217, 0.0
    %229 = vset.pattern.permute.xlu0 0
    %230 = vperm.xlu0 %229, %v39
    %v231 = vpop.permute.xlu0 %230
    %234 = vset.pattern.permute.xlu0 0
    %235 = vperm.xlu0 %234, %v40
    %v236 = vpop.permute.xlu0 %235
    %239 = vset.pattern.permute.xlu0 0
    %240 = vperm.xlu0 %239, %v41
    %v241 = vpop.permute.xlu0 %240
    %244 = vset.pattern.permute.xlu0 0
    %245 = vperm.xlu0 %244, %v42
    %v246 = vpop.permute.xlu0 %245
    %249 = vset.pattern.permute.xlu0 0
    %250 = vperm.xlu0 %249, %v43
    %v251 = vpop.permute.xlu0 %250
    %254 = vset.pattern.permute.xlu0 0
    %255 = vperm.xlu0 %254, %v44
    %v256 = vpop.permute.xlu0 %255
    %259 = vset.pattern.permute.xlu0 0
    %260 = vperm.xlu0 %259, %v45
    %v261 = vpop.permute.xlu0 %260
    %264 = vset.pattern.permute.xlu0 0
    %265 = vperm.xlu0 %264, %v46
    %v266 = vpop.permute.xlu0 %265
    %v268 = vmul.f32 %v220, %v231
    %v269 = vmul.f32 %v221, %v236
    %v270 = vmul.f32 %v222, %v241
    %v271 = vmul.f32 %v223, %v246
    %v272 = vmul.f32 %v224, %v251
    %v273 = vmul.f32 %v225, %v256
    %v274 = vmul.f32 %v226, %v261
    %v275 = vmul.f32 %v227, %v266
    %vm276 = vcmask 64512
    %v277 = vsel %vm276, %v268, 0.0
    %v278 = vsel %vm276, %v269, 0.0
    %v279 = vadd.f32 %v277, %v278
    %v280 = vsel %vm276, %v270, 0.0
    %v281 = vadd.f32 %v279, %v280
    %v282 = vsel %vm276, %v271, 0.0
    %v283 = vadd.f32 %v281, %v282
    %v284 = vsel %vm276, %v272, 0.0
    %v285 = vadd.f32 %v283, %v284
    %v286 = vsel %vm276, %v273, 0.0
    %v287 = vadd.f32 %v285, %v286
    %v288 = vsel %vm276, %v274, 0.0
    %v289 = vadd.f32 %v287, %v288
    %v290 = vsel %vm276, %v275, 0.0
    %v291 = vadd.f32 %v289, %v290
    %v292 = vrot.slane %v291, 4
    %v293 = vadd.f32 %v291, %v292
    %v294 = vrot.slane %v293, 2
    %v295 = vadd.f32 %v293, %v294
    %v296 = vrot.slane %v295, 1
    %v297 = vadd.f32 %v295, %v296
    %v298 = vadd.f32 %v297, 0.0
    %s299 = sld [smem:[#allocation2]]
    %v300 = vstv %s299
    %v301 = vadd.f32 %v298, %v300
    %vm302 = vcmask 57344
    %303 = vst.msk [vmem:[#allocation3] sm:$0x1] %vm302, %v301
    // Predicated region
    $region22: #{tpu_custom_call.1} parent=1 // pred_check
      _
    $region23: #{tpu_custom_call.1} parent=1 // pred_check_branch
      %305 = sbr.rel (0) target = $region25
    $region24: #{tpu_custom_call.1} parent=1 // pred_region
      %s307 = ssub.s32 16, 16
      %308 = vsyncadd [#allocation4], %s307
      %s310 = sshll.u32 [#allocation3], 4
      %s311 = int_to_ptr.vmem [resolvable:$true] %s310
      %313 = dma.vmem_to_hbm [thread:$0]  %s311, 16, %s5, [#allocation4]
    $region25: #{tpu_custom_call.1} parent=1 // pred_fallthru
      _
    // Predicated region
    $region26: #{tpu_custom_call.1} parent=1 // pred_check
      _
    $region27: #{tpu_custom_call.1} parent=1 // pred_check_branch
      %315 = sbr.rel (0) target = $region29
    $region28: #{tpu_custom_call.1} parent=1 // pred_region
      %316 = dma.done [#allocation4], 16
    $region29: #{tpu_custom_call.1} parent=1 // pred_fallthru
      _
    %317 = vsyncpa [#allocation4], 1

</llo_original>
